<compile_context>
chip_gen: v7x
topology: tpu7x:2x2x1
jax: 0.10.0
libtpu: 0.0.40
codegen_flags: <defaults>
</compile_context>

<pallas_src>
import functools

import jax
import jax.numpy as jnp
from jax.experimental import pallas as pl
from jax.experimental.pallas import tpu as pltpu

LANE = 128
SUB = 8
CHUNK_ROWS = 64      # rows handled per inner fori_loop iteration (8 int32 vregs)


def _count_kernel(t_ref, out_ref, *, n_classes: int, block_rows: int):
    """Accumulate per-class label counts for one (block_rows, 128) tile.

    t_ref   : (block_rows, 128) int32 labels; pad value -1 never matches.
    out_ref : (1, n_classes*8, 128) f32 per-split partial counts.  The same
              output block is revisited along the step axis (acts as the
              accumulator), so no scratch is needed.
    """
    k = pl.program_id(1)

    @pl.when(k == 0)
    def _init():
        out_ref[...] = jnp.zeros_like(out_ref)

    g = block_rows // CHUNK_ROWS          # static inner trip count
    gs = CHUNK_ROWS // SUB                # (8,128) vregs per chunk

    def chunk_body(j, carry):
        start = pl.multiple_of(j * CHUNK_ROWS, CHUNK_ROWS)
        tc = t_ref[pl.ds(start, CHUNK_ROWS), :]          # (64, 128) int32 vld
        tc3 = tc.reshape(gs, SUB, LANE)                  # layout-preserving
        new = []
        for c in range(n_classes):                       # small static C unroll
            m = (tc3 == c).astype(jnp.float32)           # cmp + cvt (VALU)
            new.append(carry[c] + jnp.sum(m, axis=0))    # leading-axis adds
        return tuple(new)

    init = tuple(jnp.zeros((SUB, LANE), jnp.float32) for _ in range(n_classes))
    parts = jax.lax.fori_loop(0, g, chunk_body, init,
                              unroll=2 if g > 1 else 1)

    # Only C read-modify-writes of the resident output block per tile.
    for c in range(n_classes):
        sl = pl.ds(c * SUB, SUB)
        out_ref[0, sl, :] = out_ref[0, sl, :] + parts[c]


def class_weights(target: jax.Array, n_classes: int, norm_val: float = 1.1,
                  block_rows: int = 2048, n_splits: int = 2) -> jax.Array:
    """JAX/Pallas equivalent of BaseLossExtension._class_weights.

    Assumes integer class labels; values outside [0, n_classes-1] are ignored
    (matching torch.histc's exclusion of out-of-range values).
    """
    n_classes = int(n_classes)
    t = target.reshape(-1).astype(jnp.int32)   # no-op if already int32
    n = int(t.shape[0])
    if n == 0:
        # torch: all-zero hist -> every class masked to 0.0 (identical output).
        return jnp.zeros((n_classes,), jnp.float32)

    rows_needed = -(-n // LANE)

    # Block rows: multiple of CHUNK_ROWS, roughly min(block_rows, rows_needed).
    tr = max(CHUNK_ROWS,
             (min(int(block_rows), rows_needed + CHUNK_ROWS - 1)
              // CHUNK_ROWS) * CHUNK_ROWS)

    steps_total = -(-rows_needed // tr)
    splits = int(n_splits) if steps_total >= int(n_splits) else 1
    steps = -(-steps_total // splits)

    # Pad with -1 up to a full grid of blocks so no in-kernel masking is needed.
    rows_pad = splits * steps * tr
    n_pad = rows_pad * LANE
    if n_pad != n:
        t = jnp.pad(t, (0, n_pad - n), constant_values=-1)
    t2 = t.reshape(rows_pad, LANE)

    counts = pl.pallas_call(
        functools.partial(_count_kernel, n_classes=n_classes, block_rows=tr),
        grid=(splits, steps),
        out_shape=jax.ShapeDtypeStruct((splits, n_classes * SUB, LANE),
                                       jnp.float32),
        in_specs=[pl.BlockSpec((tr, LANE), lambda s, k: (s * steps + k, 0))],
        out_specs=pl.BlockSpec((1, n_classes * SUB, LANE),
                               lambda s, k: (s, 0, 0)),
        compiler_params=pltpu.CompilerParams(
            dimension_semantics=("parallel", "arbitrary")),
    )(t2)

    # Tiny epilogue in plain JAX (C elements): partial counts -> weights.
    hist = counts.reshape(splits, n_classes, SUB, LANE).sum(axis=(0, 2, 3))
    total = jnp.maximum(hist.sum(), jnp.float32(1.0))  # 0-guard; same observable
                                                       # result as torch (all-zero
                                                       # hist masks all weights)
    norm_hist = hist / total + jnp.float32(norm_val)
    wts = 1.0 / jnp.log(norm_hist)
    return jnp.where(hist == 0.0, jnp.float32(0.0), wts)


# TODO(synk): BaseLossExtension.forward(prediction, target) is abstract
# (raises NotImplementedError) — nothing to lower for it.


def _class_weights_ref(target: jax.Array, n_classes: int,
                       norm_val: float = 1.1) -> jax.Array:
    """Pure-JAX reference mirroring the torch.histc-based weights."""
    t = target.astype(jnp.int32).reshape(-1)
    valid = (t >= 0) & (t <= n_classes - 1)
    hist = jnp.zeros((n_classes,), jnp.float32)
    hist = hist.at[jnp.clip(t, 0, n_classes - 1)].add(valid.astype(jnp.float32))
    norm = hist / jnp.maximum(hist.sum(), 1.0) + norm_val
    wts = 1.0 / jnp.log(norm)
    return jnp.where(hist == 0.0, 0.0, wts)


if __name__ == "__main__":
    key = jax.random.PRNGKey(0)
    k1, k2, k3, k4 = jax.random.split(key, 4)

    # Test 1: segmentation-style target (batch=2, 16x16).
    n_classes = 4
    target = jax.random.randint(k1, (2, 16, 16), minval=0, maxval=n_classes,
                                dtype=jnp.int32)
    wts = jax.block_until_ready(class_weights(target, n_classes, norm_val=1.1))
    ref = _class_weights_ref(target, n_classes, norm_val=1.1)
    assert wts.shape == (n_classes,)
    assert jnp.allclose(wts, ref, atol=1e-5, rtol=1e-5), (wts, ref)

    # float-typed labels go through the same path (torch calls .float()).
    wts_f = jax.block_until_ready(
        class_weights(target.astype(jnp.float32), n_classes, norm_val=1.1))
    assert jnp.allclose(wts_f, ref, atol=1e-5, rtol=1e-5), (wts_f, ref)

    # Test 2: ragged size (wrapper -1 padding) + a class that never appears.
    n_classes2 = 5
    target2 = jax.random.randint(k2, (3, 7, 6), minval=0, maxval=4,
                                 dtype=jnp.int32)          # class 4 absent
    wts2 = jax.block_until_ready(class_weights(target2, n_classes2, norm_val=1.1))
    ref2 = _class_weights_ref(target2, n_classes2, norm_val=1.1)
    assert jnp.allclose(wts2, ref2, atol=1e-5, rtol=1e-5), (wts2, ref2)
    assert bool(wts2[4] == 0.0)

    # Test 3: default (large) block on a multi-chunk input.
    n_classes3 = 6
    target3 = jax.random.randint(k3, (4, 32, 32), minval=0, maxval=n_classes3,
                                 dtype=jnp.int32)
    wts3 = jax.block_until_ready(class_weights(target3, n_classes3, norm_val=1.1))
    ref3 = _class_weights_ref(target3, n_classes3, norm_val=1.1)
    assert jnp.allclose(wts3, ref3, atol=1e-5, rtol=1e-5), (wts3, ref3)

    # Test 4: force multi-split (parallel axis) x multi-step (accumulation) grid.
    n_classes4 = 3
    target4 = jax.random.randint(k4, (8, 64, 64), minval=0, maxval=n_classes4,
                                 dtype=jnp.int32)
    wts4 = jax.block_until_ready(
        class_weights(target4, n_classes4, norm_val=1.1,
                      block_rows=64, n_splits=2))
    ref4 = _class_weights_ref(target4, n_classes4, norm_val=1.1)
    assert jnp.allclose(wts4, ref4, atol=1e-5, rtol=1e-5), (wts4, ref4)

    print("KERNEL_OK")
</pallas_src>

<mosaic_0001>
module attributes {stable_mosaic.version = 11 : i64} {
  func.func @_count_kernel(%arg0: i32, %arg1: i32, %arg2: memref<64x128xi32, #tpu.memory_space<vmem>>, %arg3: memref<1x32x128xf32, #tpu.memory_space<vmem>>) attributes {dimension_semantics = [#tpu.dimension_semantics<parallel>, #tpu.dimension_semantics<arbitrary>], iteration_bounds = array<i64: 1, 1>, scalar_prefetch = 0 : i64, scratch_operands = 0 : i64, tpu.core_type = #tpu.core_type<tc>, window_params = [{transform_indices = @transform_0, window_bounds = array<i64: 64, 128>}, {transform_indices = @transform_1, window_bounds = array<i64: 1, 32, 128>}]} {
    %c0_i32 = arith.constant 0 : i32
    %0 = arith.cmpi eq, %arg1, %c0_i32 : i32
    %1 = arith.extui %0 : i1 to i32
    %c0_i32_0 = arith.constant 0 : i32
    %2 = arith.cmpi ne, %1, %c0_i32_0 : i32
    scf.if %2 {
      %cst_32 = arith.constant 0.000000e+00 : f32
      %60 = vector.broadcast %cst_32 : f32 to vector<1x32x128xf32>
      %c0_33 = arith.constant 0 : index
      %c0_34 = arith.constant 0 : index
      %c0_35 = arith.constant 0 : index
      %61 = vector.load %arg3[%c0_33, %c0_34, %c0_35] : memref<1x32x128xf32, #tpu.memory_space<vmem>>, vector<1x32x128xf32>
      tpu.vector_store %arg3[%c0_33, %c0_34, %c0_35], %60 {strides = array<i32>} : memref<1x32x128xf32, #tpu.memory_space<vmem>>, vector<1x32x128xf32>,
    } else {
    }
    %cst = arith.constant 0.000000e+00 : f32
    %3 = vector.broadcast %cst : f32 to vector<8x128xf32>
    %cst_1 = arith.constant 0.000000e+00 : f32
    %4 = vector.broadcast %cst_1 : f32 to vector<8x128xf32>
    %cst_2 = arith.constant 0.000000e+00 : f32
    %5 = vector.broadcast %cst_2 : f32 to vector<8x128xf32>
    %cst_3 = arith.constant 0.000000e+00 : f32
    %6 = vector.broadcast %cst_3 : f32 to vector<8x128xf32>
    %c0_i32_4 = arith.constant 0 : i32
    %c64_i32 = arith.constant 64 : i32
    %7 = arith.muli %c0_i32_4, %c64_i32 : i32
    %8 = tpu.assume_multiple %7, 64 : i32
    %9 = arith.index_cast %8 : i32 to index
    %c0 = arith.constant 0 : index
    %10 = vector.load %arg2[%9, %c0] : memref<64x128xi32, #tpu.memory_space<vmem>>, vector<64x128xi32>
    %11 = vector.shape_cast %10 : vector<64x128xi32> to vector<8x8x128xi32>
    %c0_i32_5 = arith.constant 0 : i32
    %12 = vector.broadcast %c0_i32_5 : i32 to vector<8x8x128xi32>
    %13 = arith.cmpi eq, %11, %12 : vector<8x8x128xi32>
    %14 = arith.extui %13 : vector<8x8x128xi1> to vector<8x8x128xi32>
    %15 = arith.sitofp %14 : vector<8x8x128xi32> to vector<8x8x128xf32>
    %cst_6 = arith.constant dense<0.000000e+00> : vector<8x128xf32>
    %16 = vector.multi_reduction <add>, %15, %cst_6 [0] : vector<8x8x128xf32> to vector<8x128xf32>
    %17 = arith.addf %3, %16 : vector<8x128xf32>
    %c1_i32 = arith.constant 1 : i32
    %18 = vector.broadcast %c1_i32 : i32 to vector<8x8x128xi32>
    %19 = arith.cmpi eq, %11, %18 : vector<8x8x128xi32>
    %20 = arith.extui %19 : vector<8x8x128xi1> to vector<8x8x128xi32>
    %21 = arith.sitofp %20 : vector<8x8x128xi32> to vector<8x8x128xf32>
    %cst_7 = arith.constant dense<0.000000e+00> : vector<8x128xf32>
    %22 = vector.multi_reduction <add>, %21, %cst_7 [0] : vector<8x8x128xf32> to vector<8x128xf32>
    %23 = arith.addf %4, %22 : vector<8x128xf32>
    %c2_i32 = arith.constant 2 : i32
    %24 = vector.broadcast %c2_i32 : i32 to vector<8x8x128xi32>
    %25 = arith.cmpi eq, %11, %24 : vector<8x8x128xi32>
    %26 = arith.extui %25 : vector<8x8x128xi1> to vector<8x8x128xi32>
    %27 = arith.sitofp %26 : vector<8x8x128xi32> to vector<8x8x128xf32>
    %cst_8 = arith.constant dense<0.000000e+00> : vector<8x128xf32>
    %28 = vector.multi_reduction <add>, %27, %cst_8 [0] : vector<8x8x128xf32> to vector<8x128xf32>
    %29 = arith.addf %5, %28 : vector<8x128xf32>
    %c3_i32 = arith.constant 3 : i32
    %30 = vector.broadcast %c3_i32 : i32 to vector<8x8x128xi32>
    %31 = arith.cmpi eq, %11, %30 : vector<8x8x128xi32>
    %32 = arith.extui %31 : vector<8x8x128xi1> to vector<8x8x128xi32>
    %33 = arith.sitofp %32 : vector<8x8x128xi32> to vector<8x8x128xf32>
    %cst_9 = arith.constant dense<0.000000e+00> : vector<8x128xf32>
    %34 = vector.multi_reduction <add>, %33, %cst_9 [0] : vector<8x8x128xf32> to vector<8x128xf32>
    %35 = arith.addf %6, %34 : vector<8x128xf32>
    %c1_i32_10 = arith.constant 1 : i32
    %c0_11 = arith.constant 0 : index
    %c0_12 = arith.constant 0 : index
    %c0_13 = arith.constant 0 : index
    %36 = vector.load %arg3[%c0_11, %c0_12, %c0_13] : memref<1x32x128xf32, #tpu.memory_space<vmem>>, vector<1x8x128xf32>
    %37 = vector.shape_cast %36 : vector<1x8x128xf32> to vector<8x128xf32>
    %38 = arith.addf %37, %17 : vector<8x128xf32>
    %c0_14 = arith.constant 0 : index
    %c0_15 = arith.constant 0 : index
    %c0_16 = arith.constant 0 : index
    %39 = vector.load %arg3[%c0_14, %c0_15, %c0_16] : memref<1x32x128xf32, #tpu.memory_space<vmem>>, vector<1x8x128xf32>
    %40 = vector.shape_cast %39 : vector<1x8x128xf32> to vector<8x128xf32>
    %41 = vector.shape_cast %38 : vector<8x128xf32> to vector<1x8x128xf32>
    tpu.vector_store %arg3[%c0_14, %c0_15, %c0_16], %41 {strides = array<i32>} : memref<1x32x128xf32, #tpu.memory_space<vmem>>, vector<1x8x128xf32>,
    %c0_17 = arith.constant 0 : index
    %c8 = arith.constant 8 : index
    %c0_18 = arith.constant 0 : index
    %42 = vector.load %arg3[%c0_17, %c8, %c0_18] : memref<1x32x128xf32, #tpu.memory_space<vmem>>, vector<1x8x128xf32>
    %43 = vector.shape_cast %42 : vector<1x8x128xf32> to vector<8x128xf32>
    %44 = arith.addf %43, %23 : vector<8x128xf32>
    %c0_19 = arith.constant 0 : index
    %c8_20 = arith.constant 8 : index
    %c0_21 = arith.constant 0 : index
    %45 = vector.load %arg3[%c0_19, %c8_20, %c0_21] : memref<1x32x128xf32, #tpu.memory_space<vmem>>, vector<1x8x128xf32>
    %46 = vector.shape_cast %45 : vector<1x8x128xf32> to vector<8x128xf32>
    %47 = vector.shape_cast %44 : vector<8x128xf32> to vector<1x8x128xf32>
    tpu.vector_store %arg3[%c0_19, %c8_20, %c0_21], %47 {strides = array<i32>} : memref<1x32x128xf32, #tpu.memory_space<vmem>>, vector<1x8x128xf32>,
    %c0_22 = arith.constant 0 : index
    %c16 = arith.constant 16 : index
    %c0_23 = arith.constant 0 : index
    %48 = vector.load %arg3[%c0_22, %c16, %c0_23] : memref<1x32x128xf32, #tpu.memory_space<vmem>>, vector<1x8x128xf32>
    %49 = vector.shape_cast %48 : vector<1x8x128xf32> to vector<8x128xf32>
    %50 = arith.addf %49, %29 : vector<8x128xf32>
    %c0_24 = arith.constant 0 : index
    %c16_25 = arith.constant 16 : index
    %c0_26 = arith.constant 0 : index
    %51 = vector.load %arg3[%c0_24, %c16_25, %c0_26] : memref<1x32x128xf32, #tpu.memory_space<vmem>>, vector<1x8x128xf32>
    %52 = vector.shape_cast %51 : vector<1x8x128xf32> to vector<8x128xf32>
    %53 = vector.shape_cast %50 : vector<8x128xf32> to vector<1x8x128xf32>
    tpu.vector_store %arg3[%c0_24, %c16_25, %c0_26], %53 {strides = array<i32>} : memref<1x32x128xf32, #tpu.memory_space<vmem>>, vector<1x8x128xf32>,
    %c0_27 = arith.constant 0 : index
    %c24 = arith.constant 24 : index
    %c0_28 = arith.constant 0 : index
    %54 = vector.load %arg3[%c0_27, %c24, %c0_28] : memref<1x32x128xf32, #tpu.memory_space<vmem>>, vector<1x8x128xf32>
    %55 = vector.shape_cast %54 : vector<1x8x128xf32> to vector<8x128xf32>
    %56 = arith.addf %55, %35 : vector<8x128xf32>
    %c0_29 = arith.constant 0 : index
    %c24_30 = arith.constant 24 : index
    %c0_31 = arith.constant 0 : index
    %57 = vector.load %arg3[%c0_29, %c24_30, %c0_31] : memref<1x32x128xf32, #tpu.memory_space<vmem>>, vector<1x8x128xf32>
    %58 = vector.shape_cast %57 : vector<1x8x128xf32> to vector<8x128xf32>
    %59 = vector.shape_cast %56 : vector<8x128xf32> to vector<1x8x128xf32>
    tpu.vector_store %arg3[%c0_29, %c24_30, %c0_31], %59 {strides = array<i32>} : memref<1x32x128xf32, #tpu.memory_space<vmem>>, vector<1x8x128xf32>,
    return
  }
  func.func @transform_0(%arg0: i32, %arg1: i32) -> (i32, i32) {
    %c1_i32 = arith.constant 1 : i32
    %0 = arith.muli %arg0, %c1_i32 : i32
    %1 = arith.addi %0, %arg1 : i32
    %c0_i32 = arith.constant 0 : i32
    %c0_i32_0 = arith.constant 0 : i32
    return %1, %c0_i32 : i32, i32
  }
  func.func @transform_1(%arg0: i32, %arg1: i32) -> (i32, i32, i32) {
    %c0_i32 = arith.constant 0 : i32
    %c0_i32_0 = arith.constant 0 : i32
    %c0_i32_1 = arith.constant 0 : i32
    return %arg0, %c0_i32, %c0_i32_0 : i32, i32, i32
  }
}

</mosaic_0001>

<llo_original>
// kernel: tpu_custom_call.1
$region0: #{tpu_custom_call.1}
  #allocation0 [shape = 'u32[]', space=smem, size = 0x4, offset = 0x4, fixed_abs, tag = 'smem constant byte address 0x4 - core index']
  #allocation1 [shape = 'u32[144,128]{1,0:T(1,128)}', space=vmem, size = 0x12000, scoped, tag = 'internal scratch']
  %s0 = inlined_call_operand.hbm [shape: s32[64,128], index: 0, kind: input, shape index: {}]
  %s1 = inlined_call_operand.hbm [shape: f32[1,32,128], index: 1, kind: output, shape index: {}]
  %s2 = sld [smem:[#allocation0]]
  $region22: #{tpu_custom_call.1} parent=0
    _
  %s4 = ssub.s32 1, %s2
  %s5 = scalar_select 0, %s4, %s2
  $region1: #{tpu_custom_call.1} parent=0
    #allocation2 [shape = 'u8[32768]{0}', space=vmem, size = 0x8000, scoped, tag = 'input window, operand 0, single buffered']
    #allocation3 [shape = 's32[1]{0}', space=sflag, size = 0x4, scoped, tag = 'scoped memory for tpu_custom_call.1']
    #allocation4 [shape = 's32[1]{0}', space=sflag, size = 0x4, scoped, tag = 'scoped memory for tpu_custom_call.1']
    #allocation5 [shape = 'u8[16384]{0}', space=vmem, size = 0x4000, scoped, tag = 'output window, operand 0, single buffered']
    %6 = vsyncpa [#allocation3], 0
    %7 = vsyncpa [#allocation4], 0
    // Predicated region
    $region2: #{tpu_custom_call.1} parent=1 // pred_check
      _
    $region3: #{tpu_custom_call.1} parent=1 // pred_check_branch
      %9 = sbr.rel (0) target = $region5
    $region4: #{tpu_custom_call.1} parent=1 // pred_region
      %s10 = sadd.s32 0, 0
      %s11 = smul.u32 8, %s10
      %s13 = ssub.s32 1024, 1024
      %14 = vsyncadd [#allocation3], %s13
      %s15 = smul.addr %s11, 128
      %s16 = scalar_lea.hbm %s0, %s15
      %s17 = sshll.u32 [#allocation2], 4
      %s18 = int_to_ptr.vmem [resolvable:$true] %s17
      %23 = dma.hbm_to_vmem [thread:$0]  %s16, 1024, %s18, [#allocation3], 128, 128, 8
    $region5: #{tpu_custom_call.1} parent=1 // pred_fallthru
      _
    // Predicated region
    $region6: #{tpu_custom_call.1} parent=1 // pred_check
      _
    $region7: #{tpu_custom_call.1} parent=1 // pred_check_branch
      %25 = sbr.rel (0) target = $region9
    $region8: #{tpu_custom_call.1} parent=1 // pred_region
      %26 = dma.done [#allocation3], 1024
    $region9: #{tpu_custom_call.1} parent=1 // pred_fallthru
      _
    %s27 = sadd.s32 0, 0
    %s28 = smul.u32 8, %s27
    %p29 = scmp.eq.s32.totalorder 0, 0
    // Predicated region
    $region10: #{tpu_custom_call.1} parent=1 // pred_check
      %p30 = pneg %p29
    $region11: #{tpu_custom_call.1} parent=1 // pred_check_branch
      %32 = sbr.rel (%p30) target = $region13
    $region12: #{tpu_custom_call.1} parent=1 // pred_region
      %33 = vst [vmem:[#allocation5] sm:$0xff] 0.0
      %34 = vst [vmem:[#allocation5 + $0x8] sm:$0xff] 0.0
      %35 = vst [vmem:[#allocation5 + $0x10] sm:$0xff] 0.0
      %36 = vst [vmem:[#allocation5 + $0x18] sm:$0xff] 0.0
    $region13: #{tpu_custom_call.1} parent=1 // pred_fallthru
      _
    %v37 = vld [vmem:[#allocation2] sm:$0xff]
    %v38 = vld [vmem:[#allocation2 + $0x8] sm:$0xff]
    %v39 = vld [vmem:[#allocation2 + $0x10] sm:$0xff]
    %v40 = vld [vmem:[#allocation2 + $0x18] sm:$0xff]
    %v41 = vld [vmem:[#allocation2 + $0x20] sm:$0xff]
    %v42 = vld [vmem:[#allocation2 + $0x28] sm:$0xff]
    %v43 = vld [vmem:[#allocation2 + $0x30] sm:$0xff]
    %v44 = vld [vmem:[#allocation2 + $0x38] sm:$0xff]
    %vm45 = vcmp.eq.s32.totalorder %v37, 0
    %vm46 = vcmp.eq.s32.totalorder %v38, 0
    %vm47 = vcmp.eq.s32.totalorder %v39, 0
    %vm48 = vcmp.eq.s32.totalorder %v40, 0
    %vm49 = vcmp.eq.s32.totalorder %v41, 0
    %vm50 = vcmp.eq.s32.totalorder %v42, 0
    %vm51 = vcmp.eq.s32.totalorder %v43, 0
    %vm52 = vcmp.eq.s32.totalorder %v44, 0
    %v53 = vsel %vm45, 1, 0
    %v54 = vsel %vm46, 1, 0
    %v55 = vsel %vm47, 1, 0
    %v56 = vsel %vm48, 1, 0
    %v57 = vsel %vm49, 1, 0
    %v58 = vsel %vm50, 1, 0
    %v59 = vsel %vm51, 1, 0
    %v60 = vsel %vm52, 1, 0
    %v61 = vcvt.s32.f32 %v53
    %v62 = vcvt.s32.f32 %v54
    %v63 = vcvt.s32.f32 %v55
    %v64 = vcvt.s32.f32 %v56
    %v65 = vcvt.s32.f32 %v57
    %v66 = vcvt.s32.f32 %v58
    %v67 = vcvt.s32.f32 %v59
    %v68 = vcvt.s32.f32 %v60
    %v69 = vadd.f32 %v61, %v62
    %v70 = vadd.f32 %v69, %v63
    %v71 = vadd.f32 %v70, %v64
    %v72 = vadd.f32 %v71, %v65
    %v73 = vadd.f32 %v72, %v66
    %v74 = vadd.f32 %v73, %v67
    %v75 = vadd.f32 %v74, %v68
    %v76 = vadd.f32 %v75, 0.0
    %vm77 = vcmp.eq.s32.totalorder %v37, 1
    %vm78 = vcmp.eq.s32.totalorder %v38, 1
    %vm79 = vcmp.eq.s32.totalorder %v39, 1
    %vm80 = vcmp.eq.s32.totalorder %v40, 1
    %vm81 = vcmp.eq.s32.totalorder %v41, 1
    %vm82 = vcmp.eq.s32.totalorder %v42, 1
    %vm83 = vcmp.eq.s32.totalorder %v43, 1
    %vm84 = vcmp.eq.s32.totalorder %v44, 1
    %v85 = vsel %vm77, 1, 0
    %v86 = vsel %vm78, 1, 0
    %v87 = vsel %vm79, 1, 0
    %v88 = vsel %vm80, 1, 0
    %v89 = vsel %vm81, 1, 0
    %v90 = vsel %vm82, 1, 0
    %v91 = vsel %vm83, 1, 0
    %v92 = vsel %vm84, 1, 0
    %v93 = vcvt.s32.f32 %v85
    %v94 = vcvt.s32.f32 %v86
    %v95 = vcvt.s32.f32 %v87
    %v96 = vcvt.s32.f32 %v88
    %v97 = vcvt.s32.f32 %v89
    %v98 = vcvt.s32.f32 %v90
    %v99 = vcvt.s32.f32 %v91
    %v100 = vcvt.s32.f32 %v92
    %v101 = vadd.f32 %v93, %v94
    %v102 = vadd.f32 %v101, %v95
    %v103 = vadd.f32 %v102, %v96
    %v104 = vadd.f32 %v103, %v97
    %v105 = vadd.f32 %v104, %v98
    %v106 = vadd.f32 %v105, %v99
    %v107 = vadd.f32 %v106, %v100
    %v108 = vadd.f32 %v107, 0.0
    %vm109 = vcmp.eq.s32.totalorder %v37, 2
    %vm110 = vcmp.eq.s32.totalorder %v38, 2
    %vm111 = vcmp.eq.s32.totalorder %v39, 2
    %vm112 = vcmp.eq.s32.totalorder %v40, 2
    %vm113 = vcmp.eq.s32.totalorder %v41, 2
    %vm114 = vcmp.eq.s32.totalorder %v42, 2
    %vm115 = vcmp.eq.s32.totalorder %v43, 2
    %vm116 = vcmp.eq.s32.totalorder %v44, 2
    %v117 = vsel %vm109, 1, 0
    %v118 = vsel %vm110, 1, 0
    %v119 = vsel %vm111, 1, 0
    %v120 = vsel %vm112, 1, 0
    %v121 = vsel %vm113, 1, 0
    %v122 = vsel %vm114, 1, 0
    %v123 = vsel %vm115, 1, 0
    %v124 = vsel %vm116, 1, 0
    %v125 = vcvt.s32.f32 %v117
    %v126 = vcvt.s32.f32 %v118
    %v127 = vcvt.s32.f32 %v119
    %v128 = vcvt.s32.f32 %v120
    %v129 = vcvt.s32.f32 %v121
    %v130 = vcvt.s32.f32 %v122
    %v131 = vcvt.s32.f32 %v123
    %v132 = vcvt.s32.f32 %v124
    %v133 = vadd.f32 %v125, %v126
    %v134 = vadd.f32 %v133, %v127
    %v135 = vadd.f32 %v134, %v128
    %v136 = vadd.f32 %v135, %v129
    %v137 = vadd.f32 %v136, %v130
    %v138 = vadd.f32 %v137, %v131
    %v139 = vadd.f32 %v138, %v132
    %v140 = vadd.f32 %v139, 0.0
    %vm141 = vcmp.eq.s32.totalorder %v37, 3
    %vm142 = vcmp.eq.s32.totalorder %v38, 3
    %vm143 = vcmp.eq.s32.totalorder %v39, 3
    %vm144 = vcmp.eq.s32.totalorder %v40, 3
    %vm145 = vcmp.eq.s32.totalorder %v41, 3
    %vm146 = vcmp.eq.s32.totalorder %v42, 3
    %vm147 = vcmp.eq.s32.totalorder %v43, 3
    %vm148 = vcmp.eq.s32.totalorder %v44, 3
    %v149 = vsel %vm141, 1, 0
    %v150 = vsel %vm142, 1, 0
    %v151 = vsel %vm143, 1, 0
    %v152 = vsel %vm144, 1, 0
    %v153 = vsel %vm145, 1, 0
    %v154 = vsel %vm146, 1, 0
    %v155 = vsel %vm147, 1, 0
    %v156 = vsel %vm148, 1, 0
    %v157 = vcvt.s32.f32 %v149
    %v158 = vcvt.s32.f32 %v150
    %v159 = vcvt.s32.f32 %v151
    %v160 = vcvt.s32.f32 %v152
    %v161 = vcvt.s32.f32 %v153
    %v162 = vcvt.s32.f32 %v154
    %v163 = vcvt.s32.f32 %v155
    %v164 = vcvt.s32.f32 %v156
    %v165 = vadd.f32 %v157, %v158
    %v166 = vadd.f32 %v165, %v159
    %v167 = vadd.f32 %v166, %v160
    %v168 = vadd.f32 %v167, %v161
    %v169 = vadd.f32 %v168, %v162
    %v170 = vadd.f32 %v169, %v163
    %v171 = vadd.f32 %v170, %v164
    %v172 = vadd.f32 %v171, 0.0
    %v173 = vld [vmem:[#allocation5] sm:$0xff]
    %v174 = vadd.f32 %v173, %v76
    %175 = vst [vmem:[#allocation5] sm:$0xff] %v174
    %v176 = vld [vmem:[#allocation5 + $0x8] sm:$0xff]
    %v177 = vadd.f32 %v176, %v108
    %178 = vst [vmem:[#allocation5 + $0x8] sm:$0xff] %v177
    %v179 = vld [vmem:[#allocation5 + $0x10] sm:$0xff]
    %v180 = vadd.f32 %v179, %v140
    %181 = vst [vmem:[#allocation5 + $0x10] sm:$0xff] %v180
    %v182 = vld [vmem:[#allocation5 + $0x18] sm:$0xff]
    %v183 = vadd.f32 %v182, %v172
    %184 = vst [vmem:[#allocation5 + $0x18] sm:$0xff] %v183
    // Predicated region
    $region14: #{tpu_custom_call.1} parent=1 // pred_check
      _
    $region15: #{tpu_custom_call.1} parent=1 // pred_check_branch
      %186 = sbr.rel (0) target = $region17
    $region16: #{tpu_custom_call.1} parent=1 // pred_region
      %s188 = ssub.s32 512, 512
      %189 = vsyncadd [#allocation4], %s188
      %s190 = sshll.u32 [#allocation5], 4
      %s191 = int_to_ptr.vmem [resolvable:$true] %s190
      %196 = dma.vmem_to_hbm [thread:$0]  %s191, 512, %s1, [#allocation4], 128, 128, 8
    $region17: #{tpu_custom_call.1} parent=1 // pred_fallthru
      _
    // Predicated region
    $region18: #{tpu_custom_call.1} parent=1 // pred_check
      _
    $region19: #{tpu_custom_call.1} parent=1 // pred_check_branch
      %198 = sbr.rel (0) target = $region21
    $region20: #{tpu_custom_call.1} parent=1 // pred_region
      %199 = dma.done [#allocation4], 512
    $region21: #{tpu_custom_call.1} parent=1 // pred_fallthru
      _
    %200 = vsyncpa [#allocation3], 1
    %201 = vsyncpa [#allocation4], 1

</llo_original>
